<compile_context>
chip_gen: v5e
topology: v5e:2x2
jax: 0.10.0
libtpu: 0.0.40
codegen_flags: <defaults>
</compile_context>

<pallas_src>
import functools

import jax
import jax.numpy as jnp
from jax.experimental import pallas as pl
from jax.experimental.pallas import tpu as pltpu

EPS = 1e-5
LEAKY_SLOPE = 0.01  # InPlaceABNSync default activation_param


# ---------------------------------------------------------------------------
# Pallas kernel 1: all pyramid stages in ONE call.
# 1x1 conv (matmul) + BN affine + leaky_relu, per stage, on the pooled pixels.
# Row chunks are padded to multiples of 8 so every slice is sublane-aligned.
# ---------------------------------------------------------------------------
def _stages_kernel(row_blocks, x_ref, w_ref, scale_ref, shift_ref, o_ref):
    # x_ref:     (R_pad, Cin)  bf16, rows grouped stage-major (each chunk 8-aligned)
    # w_ref:     (S, Cin, Cout) bf16
    # scale_ref: (S, Cout) f32     gamma / sqrt(var + eps)
    # shift_ref: (S, Cout) f32     beta - mean * scale
    # o_ref:     (R_pad, Cout) f32
    for j, (off, rows_p) in enumerate(row_blocks):
        xj = x_ref[off:off + rows_p, :]
        yj = jnp.dot(xj, w_ref[j], preferred_element_type=jnp.float32)
        yj = yj * scale_ref[j:j + 1, :] + shift_ref[j:j + 1, :]
        yj = jnp.where(yj >= 0.0, yj, LEAKY_SLOPE * yj)      # InPlaceABN leaky_relu
        o_ref[off:off + rows_p, :] = yj.astype(o_ref.dtype)


def stages_conv_bn(pooled_2d, w_s, scale_s, shift_s, row_blocks):
    R = pooled_2d.shape[0]
    Cout = w_s.shape[-1]
    return pl.pallas_call(
        functools.partial(_stages_kernel, tuple(row_blocks)),
        out_shape=jax.ShapeDtypeStruct((R, Cout), jnp.float32),
    )(pooled_2d, w_s, scale_s, shift_s)


# ---------------------------------------------------------------------------
# Pallas kernel 2: fused 3x3 conv (pad=1) + BN affine + ReLU, tiled.
# grid = (N, H // TH, Cin // TK); Cin is the reduction axis (last, "arbitrary").
# Weights are fully VMEM-resident (constant block index) and k-sliced in-kernel.
# ---------------------------------------------------------------------------
def _bottleneck_kernel(x_top_ref, x_mid_ref, x_bot_ref, w_ref, scale_ref, shift_ref,
                       o_ref, xbuf_ref, pbuf_ref, acc_ref):
    # x_top_ref: (1, 1, W, TK)   bf16  row above this row-tile
    # x_mid_ref: (1, TH, W, TK)  bf16  the row-tile itself
    # x_bot_ref: (1, 1, W, TK)   bf16  row below this row-tile
    # w_ref:     (3, nK, 3*TK, Cout) bf16  FULL weight, resident across the grid
    #            w_ref[dy, k, dx*TK + c, :] == conv_w[dy, dx, k*TK + c, :]
    # scale_ref: (1, Cout) f32 ; shift_ref: (1, Cout) f32
    # o_ref:     (1, TH, W, Cout) bf16
    # xbuf_ref:  VMEM (TH+2, W+2, TK)   bf16  zero-bordered padded tile
    # pbuf_ref:  VMEM ((TH+2)*W, 3*TK)  bf16  dx-expanded patch buffer
    # acc_ref:   VMEM (TH*W, Cout) f32        accumulator across the Cin grid axis
    _, TH, W, TK = x_mid_ref.shape
    Cout = o_ref.shape[3]
    i = pl.program_id(1)
    k = pl.program_id(2)
    n_i = pl.num_programs(1)
    n_k = pl.num_programs(2)

    @pl.when(k == 0)
    def _init():
        acc_ref[...] = jnp.zeros_like(acc_ref)
        # Only the two border columns (left/right conv padding) need zeroing;
        # they are never overwritten by any k step of this (n, i).
        xbuf_ref[:, 0:1, :] = jnp.zeros((TH + 2, 1, TK), xbuf_ref.dtype)
        xbuf_ref[:, W + 1:W + 2, :] = jnp.zeros((TH + 2, 1, TK), xbuf_ref.dtype)

    # Halo rows: pl.when guards instead of mask multiplies.  At the image
    # top/bottom border the halo row is written with zeros once (k == 0) and is
    # never touched again within this (n, i).
    @pl.when(i > 0)
    def _top():
        xbuf_ref[0, 1:W + 1, :] = x_top_ref[0, 0]

    @pl.when(jnp.logical_and(i == 0, k == 0))
    def _top_zero():
        xbuf_ref[0, 1:W + 1, :] = jnp.zeros((W, TK), xbuf_ref.dtype)

    xbuf_ref[1:TH + 1, 1:W + 1, :] = x_mid_ref[0]

    @pl.when(i < n_i - 1)
    def _bot():
        xbuf_ref[TH + 1, 1:W + 1, :] = x_bot_ref[0, 0]

    @pl.when(jnp.logical_and(i == n_i - 1, k == 0))
    def _bot_zero():
        xbuf_ref[TH + 1, 1:W + 1, :] = jnp.zeros((W, TK), xbuf_ref.dtype)

    # dx expansion: 3 relayout copies (instead of 9 per-tap slice/reshapes).
    for dx in range(3):
        pbuf_ref[:, dx * TK:(dx + 1) * TK] = (
            xbuf_ref[:, dx:dx + W, :].reshape((TH + 2) * W, TK))

    # 3 fused MXU matmuls per k step (K = 3*TK); the dy windows are contiguous
    # static slices of pbuf, so no further copies.  3 accumulator RMWs (was 9).
    for dy in range(3):
        patch = pbuf_ref[dy * W:dy * W + TH * W, :]
        acc_ref[...] += jnp.dot(patch, w_ref[dy, k],
                                preferred_element_type=jnp.float32)

    @pl.when(k == n_k - 1)
    def _epilogue():
        y = acc_ref[...] * scale_ref[...] + shift_ref[...]
        # InPlaceABN leaky_relu(0.01) -> Dropout2d (identity in eval) -> the
        # module's trailing nn.ReLU: ReLU(leaky_relu(z)) == ReLU(z).
        y = jnp.maximum(y, 0.0)
        o_ref[0] = y.reshape(TH, W, Cout).astype(o_ref.dtype)


def _pick_channel_tile(cin):
    # Cin tile must be a multiple of 128 that divides Cin, or Cin itself.
    if cin % 128 == 0:
        for t in (1024, 512, 256, 128):
            if cin % t == 0:
                return t
        return 128
    return cin


def bottleneck_conv_bn_relu(cat, w9, scale, shift, *, tile_h=8):
    # cat: (N, H, W, Cin) bf16 (unpadded — halo handled in-kernel)
    # w9:  (9, Cin, Cout) f32, tap index = dy*3 + dx
    #      (a PyTorch (Cout, Cin, 3, 3) kernel must be permuted to this layout)
    N, H, W, Cin = cat.shape
    Cout = w9.shape[-1]

    TH = min(tile_h, H)
    H_pad = -(-H // TH) * TH
    if H_pad != H:
        # Zero rows are exactly the conv zero-padding for the last real row;
        # their outputs are sliced away below.  Avoids degenerating to TH=1.
        cat = jnp.pad(cat, ((0, 0), (0, H_pad - H), (0, 0), (0, 0)))
    TK = _pick_channel_tile(Cin)
    nH, nK = H_pad // TH, Cin // TK

    # Pack weights so w_packed[dy, k, dx*TK + c, :] == w9[dy*3+dx, k*TK + c, :].
    w_packed = jnp.transpose(w9.reshape(3, 3, nK, TK, Cout), (0, 2, 1, 3, 4))
    w_packed = w_packed.reshape(3, nK, 3 * TK, Cout).astype(jnp.bfloat16)

    scale2 = scale.reshape(1, Cout).astype(jnp.float32)
    shift2 = shift.reshape(1, Cout).astype(jnp.float32)

    # Halo rows come from two extra 1-row views of the same (unpadded) input.
    top_map = lambda n, i, k: (n, jnp.maximum(i * TH - 1, 0), 0, k)
    mid_map = lambda n, i, k: (n, i, 0, k)
    bot_map = lambda n, i, k: (n, jnp.minimum((i + 1) * TH, H_pad - 1), 0, k)

    y = pl.pallas_call(
        _bottleneck_kernel,
        out_shape=jax.ShapeDtypeStruct((N, H_pad, W, Cout), jnp.bfloat16),
        grid=(N, nH, nK),
        in_specs=[
            pl.BlockSpec((1, 1, W, TK), top_map),
            pl.BlockSpec((1, TH, W, TK), mid_map),
            pl.BlockSpec((1, 1, W, TK), bot_map),
            # Full weight / BN params stay VMEM-resident (constant block index),
            # so they are DMA'd once instead of once per grid step.
            # TODO(synk): pipeline_mode=pl.Buffered(1) on these three specs would
            # drop the never-used second pipeline buffer (matters on v7x 64 MiB).
            pl.BlockSpec((3, nK, 3 * TK, Cout), lambda n, i, k: (0, 0, 0, 0)),
            pl.BlockSpec((1, Cout), lambda n, i, k: (0, 0)),
            pl.BlockSpec((1, Cout), lambda n, i, k: (0, 0)),
        ],
        out_specs=pl.BlockSpec((1, TH, W, Cout), lambda n, i, k: (n, i, 0, 0)),
        scratch_shapes=[
            pltpu.VMEM((TH + 2, W + 2, TK), jnp.bfloat16),    # zero-bordered input tile
            pltpu.VMEM(((TH + 2) * W, 3 * TK), jnp.bfloat16), # dx-expanded patch buffer
            pltpu.VMEM((TH * W, Cout), jnp.float32),          # conv accumulator
        ],
        compiler_params=pltpu.CompilerParams(
            dimension_semantics=("parallel", "parallel", "arbitrary"),
            # Fits v7x's 64 MiB VMEM with resident weights; v5e/v6e (128 MiB)
            # can raise this toward ~96 MiB together with larger tile_h / TK.
            vmem_limit_bytes=56 * 1024 * 1024,
        ),
    )(cat, cat, cat, w_packed, scale2, shift2)
    return y[:, :H] if H_pad != H else y


# ---------------------------------------------------------------------------
# XLA glue: adaptive avg pool (PyTorch bin semantics) and exact bilinear
# upsample (align_corners=True) via separable interpolation matrices.
# ---------------------------------------------------------------------------
def adaptive_avg_pool_nhwc(x, size):
    N, H, W, C = x.shape
    rows = []
    for i in range(size):
        hs, he = (i * H) // size, -(-((i + 1) * H) // size)
        cols = []
        for j in range(size):
            ws, we = (j * W) // size, -(-((j + 1) * W) // size)
            cols.append(jnp.mean(x[:, hs:he, ws:we, :], axis=(1, 2)))
        rows.append(jnp.stack(cols, axis=1))
    return jnp.stack(rows, axis=1)  # (N, size, size, C)


def interp_matrix(out_size, in_size):
    # bilinear, align_corners=True
    if in_size == 1:
        return jnp.ones((out_size, 1), jnp.float32)
    if out_size == 1:
        return jnp.zeros((1, in_size), jnp.float32).at[0, 0].set(1.0)
    src = jnp.arange(out_size, dtype=jnp.float32) * (in_size - 1) / (out_size - 1)
    i0 = jnp.clip(jnp.floor(src).astype(jnp.int32), 0, in_size - 2)
    frac = src - i0.astype(jnp.float32)
    M = jnp.zeros((out_size, in_size), jnp.float32)
    M = M.at[jnp.arange(out_size), i0].add(1.0 - frac)
    M = M.at[jnp.arange(out_size), i0 + 1].add(frac)
    return M


def bn_affine(gamma, beta, mean, var):
    scale = gamma / jnp.sqrt(var + EPS)
    shift = beta - mean * scale
    return scale, shift


# ---------------------------------------------------------------------------
# Parameter init (deterministic, synthetic)
# ---------------------------------------------------------------------------
def init_params(key, features, out_features, sizes):
    params = {"stages": []}
    for _ in sizes:
        key, kw, kg, kb = jax.random.split(key, 4)
        w = jax.random.normal(kw, (features, out_features), jnp.float32) * 0.1
        gamma = 1.0 + 0.1 * jax.random.normal(kg, (out_features,), jnp.float32)
        beta = 0.1 * jax.random.normal(kb, (out_features,), jnp.float32)
        mean = jnp.zeros((out_features,), jnp.float32)
        var = jnp.ones((out_features,), jnp.float32)
        params["stages"].append((w, gamma, beta, mean, var))
    cin_total = features + len(sizes) * out_features
    key, kw, kg, kb = jax.random.split(key, 4)
    # channel order matches torch.cat([stage1..stage4, feats], dim=1)
    w9 = jax.random.normal(kw, (9, cin_total, out_features), jnp.float32) * 0.05
    params["bottleneck"] = (
        w9,
        1.0 + 0.1 * jax.random.normal(kg, (out_features,), jnp.float32),
        0.1 * jax.random.normal(kb, (out_features,), jnp.float32),
        jnp.zeros((out_features,), jnp.float32),
        jnp.ones((out_features,), jnp.float32),
    )
    return params


# ---------------------------------------------------------------------------
# Full PSPModule forward
# ---------------------------------------------------------------------------
def psp_forward(feats_nchw, params, sizes=(1, 2, 3, 6), tile_h=8):
    # feats_nchw: (N, C, H, W)  -> NHWC inside
    x = jnp.transpose(feats_nchw, (0, 2, 3, 1)).astype(jnp.float32)
    N, H, W, C = x.shape
    Cout = params["stages"][0][0].shape[1]

    # --- pyramid pooling + 1x1 conv + BN + leaky_relu: one merged Pallas call ---
    chunks, row_blocks = [], []
    off = 0
    for s in sizes:
        rows = N * s * s
        rows_p = -(-rows // 8) * 8                 # sublane-align each stage chunk
        p = adaptive_avg_pool_nhwc(x, s).reshape(rows, C)
        if rows_p != rows:
            p = jnp.pad(p, ((0, rows_p - rows), (0, 0)))
        chunks.append(p)
        row_blocks.append((off, rows_p))
        off += rows_p
    x2d = jnp.concatenate(chunks, axis=0).astype(jnp.bfloat16)           # (R_pad, C)

    w_s = jnp.stack([w for (w, *_r) in params["stages"]]).astype(jnp.bfloat16)
    sc, sh = [], []
    for (_, gamma, beta, mean, var) in params["stages"]:
        a, b = bn_affine(gamma, beta, mean, var)
        sc.append(a)
        sh.append(b)
    scale_s = jnp.stack(sc).astype(jnp.float32)                          # (S, Cout)
    shift_s = jnp.stack(sh).astype(jnp.float32)

    stage_out = stages_conv_bn(x2d, w_s, scale_s, shift_s, row_blocks)   # (R_pad, Cout) f32

    # --- exact bilinear upsample (align_corners=True) + channel concat in bf16 ---
    # TODO(synk): fuse the upsample + concat into the bottleneck kernel so the
    # (N,H,W,C+4*Cout) concat tensor never needs to exist in HBM.
    priors = []
    for s, (off_p, _rows_p) in zip(sizes, row_blocks):
        rows = N * s * s
        oj = stage_out[off_p:off_p + rows].reshape(N, s, s, Cout)
        Mh, Mw = interp_matrix(H, s), interp_matrix(W, s)
        up = jnp.einsum("hi,nijc,wj->nhwc", Mh, oj, Mw)
        priors.append(up.astype(jnp.bfloat16))
    priors.append(x.astype(jnp.bfloat16))                                # torch.cat order
    cat = jnp.concatenate(priors, axis=-1)                               # (N,H,W,C+4*Cout) bf16

    # --- fused, tiled 3x3 conv + BN + ReLU bottleneck (bf16 output) ---
    w9, gamma, beta, mean, var = params["bottleneck"]
    scale, shift = bn_affine(gamma, beta, mean, var)
    y = bottleneck_conv_bn_relu(cat, w9, scale, shift, tile_h=tile_h)    # (N,H,W,Cout) bf16
    return jnp.transpose(y, (0, 3, 1, 2)).astype(jnp.float32)            # back to NCHW f32


if __name__ == "__main__":
    N, C, H, W = 2, 4, 16, 16
    OUT_FEATURES = 8
    SIZES = (1, 2, 3, 6)

    key = jax.random.PRNGKey(0)
    key, kx = jax.random.split(key)
    feats = jax.random.normal(kx, (N, C, H, W), jnp.float32)

    params = init_params(key, C, OUT_FEATURES, SIZES)

    out = psp_forward(feats, params, SIZES, tile_h=8)
    out = jax.block_until_ready(out)
    assert out.shape == (N, OUT_FEATURES, H, W), out.shape
    assert bool(jnp.all(jnp.isfinite(out)))
    assert bool(jnp.all(out >= 0.0))  # final ReLU
    print("KERNEL_OK")
</pallas_src>

<mosaic_0001>
module attributes {stable_mosaic.version = 11 : i64} {
  func.func @_stages_kernel(%arg0: memref<112x4xbf16, #tpu.memory_space<vmem>>, %arg1: memref<4x4x8xbf16, #tpu.memory_space<vmem>>, %arg2: memref<4x8xf32, #tpu.memory_space<vmem>>, %arg3: memref<4x8xf32, #tpu.memory_space<vmem>>, %arg4: memref<112x8xf32, #tpu.memory_space<vmem>>) attributes {dimension_semantics = [], scalar_prefetch = 0 : i64, scratch_operands = 0 : i64, tpu.core_type = #tpu.core_type<tc>} {
    %c0 = arith.constant 0 : index
    %c0_0 = arith.constant 0 : index
    %0 = vector.load %arg0[%c0, %c0_0] : memref<112x4xbf16, #tpu.memory_space<vmem>>, vector<8x4xbf16>
    %c0_1 = arith.constant 0 : index
    %c0_2 = arith.constant 0 : index
    %c0_3 = arith.constant 0 : index
    %1 = vector.load %arg1[%c0_1, %c0_2, %c0_3] : memref<4x4x8xbf16, #tpu.memory_space<vmem>>, vector<1x4x8xbf16>
    %2 = vector.shape_cast %1 : vector<1x4x8xbf16> to vector<4x8xbf16>
    %cst = arith.constant dense<0.000000e+00> : vector<8x8xf32>
    %3 = tpu.matmul %0, %2, %cst {dimension_numbers = #tpu.dot_dimension_numbers<[1], [0], [0], [1], [0, 0, 1, 1], [], []>} : vector<8x4xbf16>, vector<4x8xbf16>, vector<8x8xf32> -> vector<8x8xf32>
    %c0_4 = arith.constant 0 : index
    %c0_5 = arith.constant 0 : index
    %4 = vector.load %arg2[%c0_4, %c0_5] : memref<4x8xf32, #tpu.memory_space<vmem>>, vector<1x8xf32>
    %5 = vector.broadcast %4 : vector<1x8xf32> to vector<8x8xf32>
    %6 = arith.mulf %3, %5 : vector<8x8xf32>
    %c0_6 = arith.constant 0 : index
    %c0_7 = arith.constant 0 : index
    %7 = vector.load %arg3[%c0_6, %c0_7] : memref<4x8xf32, #tpu.memory_space<vmem>>, vector<1x8xf32>
    %8 = vector.broadcast %7 : vector<1x8xf32> to vector<8x8xf32>
    %9 = arith.addf %6, %8 : vector<8x8xf32>
    %cst_8 = arith.constant 0.000000e+00 : f32
    %10 = vector.broadcast %cst_8 : f32 to vector<8x8xf32>
    %11 = arith.cmpf oge, %9, %10 : vector<8x8xf32>
    %cst_9 = arith.constant 0.00999999977 : f32
    %12 = vector.broadcast %cst_9 : f32 to vector<8x8xf32>
    %13 = arith.mulf %12, %9 : vector<8x8xf32>
    %14 = arith.select %11, %9, %13 : vector<8x8xi1>, vector<8x8xf32>
    %c0_10 = arith.constant 0 : index
    %c0_11 = arith.constant 0 : index
    %15 = vector.load %arg4[%c0_10, %c0_11] : memref<112x8xf32, #tpu.memory_space<vmem>>, vector<8x8xf32>
    tpu.vector_store %arg4[%c0_10, %c0_11], %14 {strides = array<i32>} : memref<112x8xf32, #tpu.memory_space<vmem>>, vector<8x8xf32>,
    %c8 = arith.constant 8 : index
    %c0_12 = arith.constant 0 : index
    %16 = vector.load %arg0[%c8, %c0_12] : memref<112x4xbf16, #tpu.memory_space<vmem>>, vector<8x4xbf16>
    %c1 = arith.constant 1 : index
    %c0_13 = arith.constant 0 : index
    %c0_14 = arith.constant 0 : index
    %17 = vector.load %arg1[%c1, %c0_13, %c0_14] : memref<4x4x8xbf16, #tpu.memory_space<vmem>>, vector<1x4x8xbf16>
    %18 = vector.shape_cast %17 : vector<1x4x8xbf16> to vector<4x8xbf16>
    %cst_15 = arith.constant dense<0.000000e+00> : vector<8x8xf32>
    %19 = tpu.matmul %16, %18, %cst_15 {dimension_numbers = #tpu.dot_dimension_numbers<[1], [0], [0], [1], [0, 0, 1, 1], [], []>} : vector<8x4xbf16>, vector<4x8xbf16>, vector<8x8xf32> -> vector<8x8xf32>
    %c1_16 = arith.constant 1 : index
    %c0_17 = arith.constant 0 : index
    %20 = vector.load %arg2[%c1_16, %c0_17] : memref<4x8xf32, #tpu.memory_space<vmem>>, vector<1x8xf32>
    %21 = vector.broadcast %20 : vector<1x8xf32> to vector<8x8xf32>
    %22 = arith.mulf %19, %21 : vector<8x8xf32>
    %c1_18 = arith.constant 1 : index
    %c0_19 = arith.constant 0 : index
    %23 = vector.load %arg3[%c1_18, %c0_19] : memref<4x8xf32, #tpu.memory_space<vmem>>, vector<1x8xf32>
    %24 = vector.broadcast %23 : vector<1x8xf32> to vector<8x8xf32>
    %25 = arith.addf %22, %24 : vector<8x8xf32>
    %cst_20 = arith.constant 0.000000e+00 : f32
    %26 = vector.broadcast %cst_20 : f32 to vector<8x8xf32>
    %27 = arith.cmpf oge, %25, %26 : vector<8x8xf32>
    %cst_21 = arith.constant 0.00999999977 : f32
    %28 = vector.broadcast %cst_21 : f32 to vector<8x8xf32>
    %29 = arith.mulf %28, %25 : vector<8x8xf32>
    %30 = arith.select %27, %25, %29 : vector<8x8xi1>, vector<8x8xf32>
    %c8_22 = arith.constant 8 : index
    %c0_23 = arith.constant 0 : index
    %31 = vector.load %arg4[%c8_22, %c0_23] : memref<112x8xf32, #tpu.memory_space<vmem>>, vector<8x8xf32>
    tpu.vector_store %arg4[%c8_22, %c0_23], %30 {strides = array<i32>} : memref<112x8xf32, #tpu.memory_space<vmem>>, vector<8x8xf32>,
    %c16 = arith.constant 16 : index
    %c0_24 = arith.constant 0 : index
    %32 = vector.load %arg0[%c16, %c0_24] : memref<112x4xbf16, #tpu.memory_space<vmem>>, vector<24x4xbf16>
    %c2 = arith.constant 2 : index
    %c0_25 = arith.constant 0 : index
    %c0_26 = arith.constant 0 : index
    %33 = vector.load %arg1[%c2, %c0_25, %c0_26] : memref<4x4x8xbf16, #tpu.memory_space<vmem>>, vector<1x4x8xbf16>
    %34 = vector.shape_cast %33 : vector<1x4x8xbf16> to vector<4x8xbf16>
    %cst_27 = arith.constant dense<0.000000e+00> : vector<24x8xf32>
    %35 = tpu.matmul %32, %34, %cst_27 {dimension_numbers = #tpu.dot_dimension_numbers<[1], [0], [0], [1], [0, 0, 1, 1], [], []>} : vector<24x4xbf16>, vector<4x8xbf16>, vector<24x8xf32> -> vector<24x8xf32>
    %c2_28 = arith.constant 2 : index
    %c0_29 = arith.constant 0 : index
    %36 = vector.load %arg2[%c2_28, %c0_29] : memref<4x8xf32, #tpu.memory_space<vmem>>, vector<1x8xf32>
    %37 = vector.broadcast %36 : vector<1x8xf32> to vector<24x8xf32>
    %38 = arith.mulf %35, %37 : vector<24x8xf32>
    %c2_30 = arith.constant 2 : index
    %c0_31 = arith.constant 0 : index
    %39 = vector.load %arg3[%c2_30, %c0_31] : memref<4x8xf32, #tpu.memory_space<vmem>>, vector<1x8xf32>
    %40 = vector.broadcast %39 : vector<1x8xf32> to vector<24x8xf32>
    %41 = arith.addf %38, %40 : vector<24x8xf32>
    %cst_32 = arith.constant 0.000000e+00 : f32
    %42 = vector.broadcast %cst_32 : f32 to vector<24x8xf32>
    %43 = arith.cmpf oge, %41, %42 : vector<24x8xf32>
    %cst_33 = arith.constant 0.00999999977 : f32
    %44 = vector.broadcast %cst_33 : f32 to vector<24x8xf32>
    %45 = arith.mulf %44, %41 : vector<24x8xf32>
    %46 = arith.select %43, %41, %45 : vector<24x8xi1>, vector<24x8xf32>
    %c16_34 = arith.constant 16 : index
    %c0_35 = arith.constant 0 : index
    %47 = vector.load %arg4[%c16_34, %c0_35] : memref<112x8xf32, #tpu.memory_space<vmem>>, vector<24x8xf32>
    tpu.vector_store %arg4[%c16_34, %c0_35], %46 {strides = array<i32>} : memref<112x8xf32, #tpu.memory_space<vmem>>, vector<24x8xf32>,
    %c40 = arith.constant 40 : index
    %c0_36 = arith.constant 0 : index
    %48 = vector.load %arg0[%c40, %c0_36] : memref<112x4xbf16, #tpu.memory_space<vmem>>, vector<72x4xbf16>
    %c3 = arith.constant 3 : index
    %c0_37 = arith.constant 0 : index
    %c0_38 = arith.constant 0 : index
    %49 = vector.load %arg1[%c3, %c0_37, %c0_38] : memref<4x4x8xbf16, #tpu.memory_space<vmem>>, vector<1x4x8xbf16>
    %50 = vector.shape_cast %49 : vector<1x4x8xbf16> to vector<4x8xbf16>
    %cst_39 = arith.constant dense<0.000000e+00> : vector<72x8xf32>
    %51 = tpu.matmul %48, %50, %cst_39 {dimension_numbers = #tpu.dot_dimension_numbers<[1], [0], [0], [1], [0, 0, 1, 1], [], []>} : vector<72x4xbf16>, vector<4x8xbf16>, vector<72x8xf32> -> vector<72x8xf32>
    %c3_40 = arith.constant 3 : index
    %c0_41 = arith.constant 0 : index
    %52 = vector.load %arg2[%c3_40, %c0_41] : memref<4x8xf32, #tpu.memory_space<vmem>>, vector<1x8xf32>
    %53 = vector.broadcast %52 : vector<1x8xf32> to vector<72x8xf32>
    %54 = arith.mulf %51, %53 : vector<72x8xf32>
    %c3_42 = arith.constant 3 : index
    %c0_43 = arith.constant 0 : index
    %55 = vector.load %arg3[%c3_42, %c0_43] : memref<4x8xf32, #tpu.memory_space<vmem>>, vector<1x8xf32>
    %56 = vector.broadcast %55 : vector<1x8xf32> to vector<72x8xf32>
    %57 = arith.addf %54, %56 : vector<72x8xf32>
    %cst_44 = arith.constant 0.000000e+00 : f32
    %58 = vector.broadcast %cst_44 : f32 to vector<72x8xf32>
    %59 = arith.cmpf oge, %57, %58 : vector<72x8xf32>
    %cst_45 = arith.constant 0.00999999977 : f32
    %60 = vector.broadcast %cst_45 : f32 to vector<72x8xf32>
    %61 = arith.mulf %60, %57 : vector<72x8xf32>
    %62 = arith.select %59, %57, %61 : vector<72x8xi1>, vector<72x8xf32>
    %c40_46 = arith.constant 40 : index
    %c0_47 = arith.constant 0 : index
    %63 = vector.load %arg4[%c40_46, %c0_47] : memref<112x8xf32, #tpu.memory_space<vmem>>, vector<72x8xf32>
    tpu.vector_store %arg4[%c40_46, %c0_47], %62 {strides = array<i32>} : memref<112x8xf32, #tpu.memory_space<vmem>>, vector<72x8xf32>,
    return
  }
}

</mosaic_0001>

<llo_original>
// kernel: tpu_custom_call.1
$region0: #{tpu_custom_call.1}
  #allocation0 [shape = 'u32[]', space=smem, size = 0x4, offset = 0x4, fixed_abs, tag = 'smem constant byte address 0x4 - core index']
  #allocation1 [shape = 'u32[72,128]{1,0:T(1,128)}', space=vmem, size = 0x9000, scoped, tag = 'internal scratch']
  %s0 = inlined_call_operand.vmem [shape: bf16[112,4], index: 0, kind: input, shape index: {}]
  %s1 = inlined_call_operand.vmem [shape: bf16[4,4,8], index: 1, kind: input, shape index: {}]
  %s2 = inlined_call_operand.vmem [shape: f32[4,8], index: 2, kind: input, shape index: {}]
  %s3 = inlined_call_operand.vmem [shape: f32[4,8], index: 3, kind: input, shape index: {}]
  %s4 = inlined_call_operand.vmem [shape: f32[112,8], index: 4, kind: output, shape index: {}]
  %s5 = sld [smem:[#allocation0]]
  $region26: #{tpu_custom_call.1} parent=0
    _
  %s7 = ssub.s32 1, %s5
  %s8 = scalar_select 0, %s7, %s5
  // Predicated region
  $region2: #{tpu_custom_call.1} parent=0 // pred_check
    _
  $region3: #{tpu_custom_call.1} parent=0 // pred_check_branch
    %10 = sbr.rel (0) target = $region5
  $region4: #{tpu_custom_call.1} parent=0 // pred_region
    _
  $region5: #{tpu_custom_call.1} parent=0 // pred_fallthru
    _
  // Predicated region
  $region6: #{tpu_custom_call.1} parent=0 // pred_check
    _
  $region7: #{tpu_custom_call.1} parent=0 // pred_check_branch
    %12 = sbr.rel (0) target = $region9
  $region8: #{tpu_custom_call.1} parent=0 // pred_region
    _
  $region9: #{tpu_custom_call.1} parent=0 // pred_fallthru
    _
  // Predicated region
  $region10: #{tpu_custom_call.1} parent=0 // pred_check
    _
  $region11: #{tpu_custom_call.1} parent=0 // pred_check_branch
    %14 = sbr.rel (0) target = $region13
  $region12: #{tpu_custom_call.1} parent=0 // pred_region
    _
  $region13: #{tpu_custom_call.1} parent=0 // pred_fallthru
    _
  // Predicated region
  $region14: #{tpu_custom_call.1} parent=0 // pred_check
    _
  $region15: #{tpu_custom_call.1} parent=0 // pred_check_branch
    %16 = sbr.rel (0) target = $region17
  $region16: #{tpu_custom_call.1} parent=0 // pred_region
    _
  $region17: #{tpu_custom_call.1} parent=0 // pred_fallthru
    _
  %v18 = vld [vmem:[%s0] sm:$0xf]
  %v19 = vld [vmem:[%s1] sm:$0x3]
  %vm20 = vcmask 31744
  %v22 = vsel %vm20, %v18, 0
  %vm24 = vcmask 1041408
  %v26 = vsel %vm24, %v19, 0
  %28 = vmatpush.bf16.msra.mxu0 0
  %29 = vmatpush.bf16.msra.mxu0 0
  %30 = vmatpush.bf16.msra.mxu0 0
  %31 = vmatpush.bf16.msra.mxu0 0
  %32 = vmatpush.bf16.msra.mxu0 0
  %33 = vmatpush.bf16.msra.mxu0 0
  %34 = vmatpush.bf16.msra.mxu0 0
  %35 = vmatpush.bf16.msra.mxu0 %v26
  %36 = vmatmul.bf16.gmra.mxu0 %v22
  %v37 = vpop.f32.mrf.mxu0
  %v38 = vadd.f32 0.0, %v37
  %v39 = vpop.f32.mrf.mxu0
  %40 = vdwg.mxu0
  %v41 = vld [vmem:[%s2] sm:$0x1]
  %v42 = vperm.slane %v41, 0
  %v43 = vmul.f32 %v38, %v42
  %v44 = vld [vmem:[%s3] sm:$0x1]
  %v45 = vperm.slane %v44, 0
  %v46 = vadd.f32 %v43, %v45
  %vm47 = vcmp.ge.f32.partialorder %v46, 0.0
  %v48 = vmul.f32 %v46, 0.01
  %v49 = vsel %vm47, %v46, %v48
  %vm50 = vcmask 64512
  %51 = vst.msk [vmem:[%s4] sm:$0xff] %vm50, %v49
  %v52 = vld [vmem:[%s0 + $0x4] sm:$0xf]
  %s53 = scalar_lea.vmem %s1, 2
  %v54 = vld [vmem:[%s53] sm:$0x3]
  %v56 = vsel %vm20, %v52, 0
  %v59 = vsel %vm24, %v54, 0
  %61 = vmatpush.bf16.msra.mxu0 0
  %62 = vmatpush.bf16.msra.mxu0 0
  %63 = vmatpush.bf16.msra.mxu0 0
  %64 = vmatpush.bf16.msra.mxu0 0
  %65 = vmatpush.bf16.msra.mxu0 0
  %66 = vmatpush.bf16.msra.mxu0 0
  %67 = vmatpush.bf16.msra.mxu0 0
  %68 = vmatpush.bf16.msra.mxu0 %v59
  %69 = vmatmul.bf16.gmra.mxu0 %v56
  %v70 = vpop.f32.mrf.mxu0
  %v71 = vadd.f32 0.0, %v70
  %v72 = vpop.f32.mrf.mxu0
  %73 = vdwg.mxu0
  %v74 = vld [vmem:[%s2 + $0x1] sm:$0x1]
  %v75 = vperm.slane %v74, 0
  %v76 = vmul.f32 %v71, %v75
  %v77 = vld [vmem:[%s3 + $0x1] sm:$0x1]
  %v78 = vperm.slane %v77, 0
  %v79 = vadd.f32 %v76, %v78
  %vm80 = vcmp.ge.f32.partialorder %v79, 0.0
  %v81 = vmul.f32 %v79, 0.01
  %v82 = vsel %vm80, %v79, %v81
  %83 = vst.msk [vmem:[%s4 + $0x8] sm:$0xff] %vm50, %v82
  %v84 = vld [vmem:[%s0 + $0x8] sm:$0xf]
  %v85 = vld [vmem:[%s0 + $0xc] sm:$0xf]
  %v86 = vld [vmem:[%s0 + $0x10] sm:$0xf]
  %s87 = scalar_lea.vmem %s1, 4
  %v88 = vld [vmem:[%s87] sm:$0x3]
  %v92 = vunpack.c.l.b16 %v84
  %v93 = vunpack.c.l.b16 %v85
  %v94 = vunpack.c.l.b16 %v86
  %v95 = vpack.c.b16 %v93, %v92
  %v96 = vpack.c.b16 %v94, %v94
  %v98 = vsel %vm20, %v95, 0
  %v101 = vsel %vm20, %v96, 0
  %v104 = vsel %vm24, %v88, 0
  %106 = vmatpush.bf16.msra.mxu0 0
  %107 = vmatpush.bf16.msra.mxu0 0
  %108 = vmatpush.bf16.msra.mxu0 0
  %109 = vmatpush.bf16.msra.mxu0 0
  %110 = vmatpush.bf16.msra.mxu0 0
  %111 = vmatpush.bf16.msra.mxu0 0
  %112 = vmatpush.bf16.msra.mxu0 0
  %113 = vmatpush.bf16.msra.mxu0 %v104
  %114 = vmatmul.bf16.gmra.mxu0 %v98
  %v115 = vpop.f32.mrf.mxu0
  %v116 = vadd.f32 0.0, %v115
  %v117 = vpop.f32.mrf.mxu0
  %v118 = vadd.f32 0.0, %v117
  %119 = vmatmul.bf16.gmra.mxu0 %v101
  %v120 = vpop.f32.mrf.mxu0
  %v121 = vadd.f32 0.0, %v120
  %v122 = vpop.f32.mrf.mxu0
  %123 = vdwg.mxu0
  %v124 = vld [vmem:[%s2 + $0x2] sm:$0x1]
  %v125 = vperm.slane %v124, 0
  %v126 = vmul.f32 %v116, %v125
  %v127 = vmul.f32 %v118, %v125
  %v128 = vmul.f32 %v121, %v125
  %v129 = vld [vmem:[%s3 + $0x2] sm:$0x1]
  %v130 = vperm.slane %v129, 0
  %v131 = vadd.f32 %v126, %v130
  %v132 = vadd.f32 %v127, %v130
  %v133 = vadd.f32 %v128, %v130
  %vm134 = vcmp.ge.f32.partialorder %v131, 0.0
  %vm135 = vcmp.ge.f32.partialorder %v132, 0.0
  %vm136 = vcmp.ge.f32.partialorder %v133, 0.0
  %v137 = vmul.f32 %v131, 0.01
  %v138 = vmul.f32 %v132, 0.01
  %v139 = vmul.f32 %v133, 0.01
  %v140 = vsel %vm134, %v131, %v137
  %v141 = vsel %vm135, %v132, %v138
  %v142 = vsel %vm136, %v133, %v139
  %143 = vst.msk [vmem:[%s4 + $0x10] sm:$0xff] %vm50, %v140
  %144 = vst.msk [vmem:[%s4 + $0x18] sm:$0xff] %vm50, %v141
  %145 = vst.msk [vmem:[%s4 + $0x20] sm:$0xff] %vm50, %v142
  %v146 = vld [vmem:[%s0 + $0x14] sm:$0xf]
  %v147 = vld [vmem:[%s0 + $0x18] sm:$0xf]
  %v148 = vld [vmem:[%s0 + $0x1c] sm:$0xf]
  %v149 = vld [vmem:[%s0 + $0x20] sm:$0xf]
  %v150 = vld [vmem:[%s0 + $0x24] sm:$0xf]
  %v151 = vld [vmem:[%s0 + $0x28] sm:$0xf]
  %v152 = vld [vmem:[%s0 + $0x2c] sm:$0xf]
  %v153 = vld [vmem:[%s0 + $0x30] sm:$0xf]
  %v154 = vld [vmem:[%s0 + $0x34] sm:$0xf]
  %s155 = scalar_lea.vmem %s1, 6
  %v156 = vld [vmem:[%s155] sm:$0x3]
  %v166 = vunpack.c.l.b16 %v146
  %v167 = vunpack.c.l.b16 %v147
  %v168 = vunpack.c.l.b16 %v148
  %v169 = vunpack.c.l.b16 %v149
  %v170 = vunpack.c.l.b16 %v150
  %v171 = vunpack.c.l.b16 %v151
  %v172 = vunpack.c.l.b16 %v152
  %v173 = vunpack.c.l.b16 %v153
  %v174 = vunpack.c.l.b16 %v154
  %v175 = vpack.c.b16 %v167, %v166
  %v176 = vpack.c.b16 %v169, %v168
  %v177 = vpack.c.b16 %v171, %v170
  %v178 = vpack.c.b16 %v173, %v172
  %v179 = vpack.c.b16 %v174, %v174
  %v181 = vsel %vm20, %v175, 0
  %v184 = vsel %vm20, %v176, 0
  %v187 = vsel %vm20, %v177, 0
  %v190 = vsel %vm20, %v178, 0
  %v193 = vsel %vm20, %v179, 0
  %v196 = vsel %vm24, %v156, 0
  %198 = vmatpush.bf16.msra.mxu0 0
  %199 = vmatpush.bf16.msra.mxu0 0
  %200 = vmatpush.bf16.msra.mxu0 0
  %201 = vmatpush.bf16.msra.mxu0 0
  %202 = vmatpush.bf16.msra.mxu0 0
  %203 = vmatpush.bf16.msra.mxu0 0
  %204 = vmatpush.bf16.msra.mxu0 0
  %205 = vmatpush.bf16.msra.mxu0 %v196
  %206 = vmatmul.bf16.gmra.mxu0 %v181
  %v207 = vpop.f32.mrf.mxu0
  %v208 = vadd.f32 0.0, %v207
  %v209 = vpop.f32.mrf.mxu0
  %v210 = vadd.f32 0.0, %v209
  %211 = vmatmul.bf16.gmra.mxu0 %v184
  %v212 = vpop.f32.mrf.mxu0
  %v213 = vadd.f32 0.0, %v212
  %v214 = vpop.f32.mrf.mxu0
  %v215 = vadd.f32 0.0, %v214
  %216 = vmatmul.bf16.gmra.mxu0 %v187
  %v217 = vpop.f32.mrf.mxu0
  %v218 = vadd.f32 0.0, %v217
  %v219 = vpop.f32.mrf.mxu0
  %v220 = vadd.f32 0.0, %v219
  %221 = vmatmul.bf16.gmra.mxu0 %v190
  %v222 = vpop.f32.mrf.mxu0
  %v223 = vadd.f32 0.0, %v222
  %v224 = vpop.f32.mrf.mxu0
  %v225 = vadd.f32 0.0, %v224
  %226 = vmatmul.bf16.gmra.mxu0 %v193
  %v227 = vpop.f32.mrf.mxu0
  %v228 = vadd.f32 0.0, %v227
  %v229 = vpop.f32.mrf.mxu0
  %230 = vdwg.mxu0
  %v231 = vld [vmem:[%s2 + $0x3] sm:$0x1]
  %v232 = vperm.slane %v231, 0
  %v233 = vmul.f32 %v208, %v232
  %v234 = vmul.f32 %v210, %v232
  %v235 = vmul.f32 %v213, %v232
  %v236 = vmul.f32 %v215, %v232
  %v237 = vmul.f32 %v218, %v232
  %v238 = vmul.f32 %v220, %v232
  %v239 = vmul.f32 %v223, %v232
  %v240 = vmul.f32 %v225, %v232
  %v241 = vmul.f32 %v228, %v232
  %v242 = vld [vmem:[%s3 + $0x3] sm:$0x1]
  %v243 = vperm.slane %v242, 0
  %v244 = vadd.f32 %v233, %v243
  %v245 = vadd.f32 %v234, %v243
  %v246 = vadd.f32 %v235, %v243
  %v247 = vadd.f32 %v236, %v243
  %v248 = vadd.f32 %v237, %v243
  %v249 = vadd.f32 %v238, %v243
  %v250 = vadd.f32 %v239, %v243
  %v251 = vadd.f32 %v240, %v243
  %v252 = vadd.f32 %v241, %v243
  %vm253 = vcmp.ge.f32.partialorder %v244, 0.0
  %vm254 = vcmp.ge.f32.partialorder %v245, 0.0
  %vm255 = vcmp.ge.f32.partialorder %v246, 0.0
  %vm256 = vcmp.ge.f32.partialorder %v247, 0.0
  %vm257 = vcmp.ge.f32.partialorder %v248, 0.0
  %vm258 = vcmp.ge.f32.partialorder %v249, 0.0
  %vm259 = vcmp.ge.f32.partialorder %v250, 0.0
  %vm260 = vcmp.ge.f32.partialorder %v251, 0.0
  %vm261 = vcmp.ge.f32.partialorder %v252, 0.0
  %v262 = vmul.f32 %v244, 0.01
  %v263 = vmul.f32 %v245, 0.01
  %v264 = vmul.f32 %v246, 0.01
  %v265 = vmul.f32 %v247, 0.01
  %v266 = vmul.f32 %v248, 0.01
  %v267 = vmul.f32 %v249, 0.01
  %v268 = vmul.f32 %v250, 0.01
  %v269 = vmul.f32 %v251, 0.01
  %v270 = vmul.f32 %v252, 0.01
  %v271 = vsel %vm253, %v244, %v262
  %v272 = vsel %vm254, %v245, %v263
  %v273 = vsel %vm255, %v246, %v264
  %v274 = vsel %vm256, %v247, %v265
  %v275 = vsel %vm257, %v248, %v266
  %v276 = vsel %vm258, %v249, %v267
  %v277 = vsel %vm259, %v250, %v268
  %v278 = vsel %vm260, %v251, %v269
  %v279 = vsel %vm261, %v252, %v270
  %280 = vst.msk [vmem:[%s4 + $0x28] sm:$0xff] %vm50, %v271
  %281 = vst.msk [vmem:[%s4 + $0x30] sm:$0xff] %vm50, %v272
  %282 = vst.msk [vmem:[%s4 + $0x38] sm:$0xff] %vm50, %v273
  %283 = vst.msk [vmem:[%s4 + $0x40] sm:$0xff] %vm50, %v274
  %284 = vst.msk [vmem:[%s4 + $0x48] sm:$0xff] %vm50, %v275
  %285 = vst.msk [vmem:[%s4 + $0x50] sm:$0xff] %vm50, %v276
  %286 = vst.msk [vmem:[%s4 + $0x58] sm:$0xff] %vm50, %v277
  %287 = vst.msk [vmem:[%s4 + $0x60] sm:$0xff] %vm50, %v278
  %288 = vst.msk [vmem:[%s4 + $0x68] sm:$0xff] %vm50, %v279
  // Predicated region
  $region18: #{tpu_custom_call.1} parent=0 // pred_check
    _
  $region19: #{tpu_custom_call.1} parent=0 // pred_check_branch
    %290 = sbr.rel (0) target = $region21
  $region20: #{tpu_custom_call.1} parent=0 // pred_region
    _
  $region21: #{tpu_custom_call.1} parent=0 // pred_fallthru
    _
  // Predicated region
  $region22: #{tpu_custom_call.1} parent=0 // pred_check
    _
  $region23: #{tpu_custom_call.1} parent=0 // pred_check_branch
    %292 = sbr.rel (0) target = $region25
  $region24: #{tpu_custom_call.1} parent=0 // pred_region
    _
  $region25: #{tpu_custom_call.1} parent=0 // pred_fallthru
    _

</llo_original>
